<compile_context>
chip_gen: v6e
topology: v6e:2x2x1
jax: 0.10.0
libtpu: 0.0.40
codegen_flags: <defaults>
</compile_context>

<pallas_src>
import jax
import jax.numpy as jnp
from jax.experimental import pallas as pl
from jax.experimental.pallas import tpu as pltpu


# ----------------------------- VMEM accounting ------------------------------

def _round_up(x, m):
    return (x + m - 1) // m * m


def _sublane_pack(dtype):
    # Sub-32-bit dtypes pack along sublanes: minimal tile is (8,128) for f32,
    # (16,128) for bf16, (32,128) for int8.
    return {4: 8, 2: 16, 1: 32}.get(jnp.dtype(dtype).itemsize, 8)


def _padded_tile_bytes(rows, cols, dtype):
    """VMEM bytes actually occupied by the trailing (rows, cols) dims of a
    block: second-minor padded to the sublane packing, minor padded to 128."""
    rows = max(int(rows), 1)
    cols = max(int(cols), 1)
    return (_round_up(rows, _sublane_pack(dtype))
            * _round_up(cols, 128)
            * jnp.dtype(dtype).itemsize)


def _vmem_capacity_bytes():
    """Per-core VMEM capacity; conservative fallback is v7x's 64 MiB."""
    try:
        cap = int(getattr(pltpu.get_tpu_info(), "vmem_capacity_bytes", 0))
        if cap > 0:
            return cap
    except Exception:
        pass
    return 64 * 1024 * 1024


def _pick_batch_tile(n, per_image_bytes, slab_budget_bytes):
    """Largest TB whose double-buffered in+out slabs fit the (padded) budget,
    capped so the 'parallel' batch axis keeps >= min(4, N) steps (>= 2 per v7x
    TensorCore) and, when possible, an even step count (equal work per core)."""
    tb = max(1, slab_budget_bytes // (4 * per_image_bytes))   # 2 bufs x (in+out)
    tb = min(tb, n)
    steps = pl.cdiv(n, tb)
    min_steps = min(4, n)
    if steps < min_steps:
        tb = pl.cdiv(n, min_steps)
        steps = pl.cdiv(n, tb)
    tries = 0
    while n >= 4 and steps % 2 == 1 and steps < n and tb > 1 and tries < 64:
        tb -= 1
        steps = pl.cdiv(n, tb)
        tries += 1
    return int(tb), int(steps)


# --------------------------------- kernel -----------------------------------

def _make_se_kernel(hw, tiny_excitation):
    inv_hw = 1.0 / float(hw)

    def se_kernel(x_ref, w1_ref, b1_ref, w2_ref, b2_ref, o_ref):
        # x_ref/o_ref: (TB, C, HW).
        #   tiny path: w1: (Cr, C), w2: (C, Cr)   (PyTorch (out, in) layout)
        #   MXU  path: w1: (C, Cr), w2: (Cr, C)   ((in, out) layout)
        #   b1: (1, Cr); b2: (1, C).
        # Squeeze: global average pool, accumulated in f32 without a full-tile
        # f32 copy.
        y = jnp.sum(x_ref[...], axis=-1, dtype=jnp.float32) * inv_hw       # (TB, C)

        if tiny_excitation:
            # Excitation on the VPU: with such a tiny contraction dim the MXU
            # is ~idle and would only add push/pop latency to every grid step.
            h = jnp.sum(y[:, None, :] * w1_ref[...][None, :, :], axis=-1)  # (TB, Cr)
            h = jnp.maximum(h + b1_ref[...], 0.0)
            s = jnp.sum(h[:, None, :] * w2_ref[...][None, :, :], axis=-1)  # (TB, C)
            s = s + b2_ref[...]
        else:
            # Excitation on the MXU: weights fed in their native dtype
            # (e.g. bf16 x bf16 -> f32 accumulate), no per-step weight upcast.
            h = jnp.dot(y.astype(w1_ref.dtype), w1_ref[...],
                        preferred_element_type=jnp.float32) + b1_ref[...]
            h = jnp.maximum(h, 0.0)
            s = jnp.dot(h.astype(w2_ref.dtype), w2_ref[...],
                        preferred_element_type=jnp.float32) + b2_ref[...]
        s = jax.nn.sigmoid(s)                                               # (TB, C)

        # Scale: one multiply per element in the NATIVE dtype on the store path.
        o_ref[...] = x_ref[...] * s.astype(o_ref.dtype)[:, :, None]

    return se_kernel


# -------------------------------- wrapper ------------------------------------

def se_layer(x_nchw, w1, b1, w2, b2):
    """x_nchw: (N, C, H, W); w1: (C, Cr); b1: (Cr,); w2: (Cr, C); b2: (C,).
    Weights use the (in, out) convention (transposed PyTorch Linear weights)."""
    n, c, h, w = x_nchw.shape
    cr = w1.shape[1]
    hw = h * w
    dtype = x_nchw.dtype
    itemsize = jnp.dtype(dtype).itemsize

    x = x_nchw.reshape(n, c, hw)            # free reshape; HW is the lane axis

    # Tiny C/Cr (this module: C=4, Cr=2) -> VPU excitation with PyTorch
    # (out, in) weight layout; larger C -> MXU matmuls with (in, out) layout.
    tiny = (c <= 32 and cr <= 32)
    w1k = w1.T if tiny else w1
    w2k = w2.T if tiny else w2
    b1_2d = b1.reshape(1, cr)
    b2_2d = b2.reshape(1, c)

    # --- VMEM-aware tiling (sublane/lane padding included) -------------------
    cap = _vmem_capacity_bytes()            # 64 MiB (v7x) / 128 MiB (v5e, v6e)
    slab_budget = (3 * cap) // 8            # ~24 MiB on v7x, ~48 MiB on v5e/v6e
    per_image = _padded_tile_bytes(c, hw, dtype)        # padded (C, HW) slice
    tb, steps = _pick_batch_tile(n, per_image, slab_budget)

    weight_bytes = (_padded_tile_bytes(w1k.shape[0], w1k.shape[1], w1k.dtype)
                    + _padded_tile_bytes(w2k.shape[0], w2k.shape[1], w2k.dtype)
                    + _padded_tile_bytes(1, cr, b1.dtype)
                    + _padded_tile_bytes(1, c, b2.dtype))
    # Double-buffered x-in + x-out slabs + double-buffered (constant-index,
    # fetched once) weights + compiler headroom.
    # TODO(synk): mark the weight specs pipeline_mode=pl.Buffered(1) to drop the
    # second weight buffer (only matters for large C, e.g. C~1024).
    need = 4 * tb * per_image + 2 * weight_bytes + (2 << 20)
    if need > (3 * cap) // 4:
        # TODO(synk): fall back to a split squeeze/excitation kernel plus an
        # HW-tiled scale kernel when one double-buffered image overflows VMEM.
        raise NotImplementedError(
            f"SE tile needs ~{need} bytes of VMEM at batch-tile 1, exceeding "
            f"the budget on a chip with {cap} bytes of VMEM.")
    vmem_limit = int(min(max(need, 32 << 20), (3 * cap) // 4))

    cost = pl.CostEstimate(
        flops=int(2 * n * c * hw + 4 * n * c * cr),
        transcendentals=int(n * c),
        bytes_accessed=int(2 * n * c * hw * itemsize
                           + (w1.size + w2.size + b1.size + b2.size)
                           * jnp.dtype(w1.dtype).itemsize),
    )

    out = pl.pallas_call(
        _make_se_kernel(hw, tiny),
        out_shape=jax.ShapeDtypeStruct((n, c, hw), dtype),
        grid_spec=pltpu.PrefetchScalarGridSpec(
            num_scalar_prefetch=0,
            grid=(steps,),
            in_specs=[
                pl.BlockSpec((tb, c, hw), lambda i: (i, 0, 0)),    # x slab
                pl.BlockSpec(tuple(w1k.shape), lambda i: (0, 0)),  # w1 (resident)
                pl.BlockSpec((1, cr), lambda i: (0, 0)),           # b1
                pl.BlockSpec(tuple(w2k.shape), lambda i: (0, 0)),  # w2 (resident)
                pl.BlockSpec((1, c), lambda i: (0, 0)),            # b2
            ],
            out_specs=pl.BlockSpec((tb, c, hw), lambda i: (i, 0, 0)),
        ),
        compiler_params=pltpu.CompilerParams(
            dimension_semantics=("parallel",),
            vmem_limit_bytes=vmem_limit,
        ),
        cost_estimate=cost,
    )(x, w1k, b1_2d, w2k, b2_2d)

    return out.reshape(n, c, h, w)


def se_layer_ref(x_nchw, w1, b1, w2, b2):
    """Pure-JAX reference mirroring the PyTorch forward."""
    y = jnp.mean(x_nchw, axis=(2, 3))                    # (N, C)
    y = jnp.maximum(y @ w1 + b1, 0.0)                    # (N, Cr)
    y = jax.nn.sigmoid(y @ w2 + b2)                      # (N, C)
    return x_nchw * y[:, :, None, None]


if __name__ == "__main__":
    # Module config: channel=4, reduction=2 -> fc: Linear(4->2), ReLU, Linear(2->4), Sigmoid
    N, C, H, W = 2, 4, 16, 16
    R = 2
    CR = C // R

    key = jax.random.PRNGKey(0)
    kx, k1, k2, k3, k4 = jax.random.split(key, 5)

    x = jax.random.normal(kx, (N, C, H, W), dtype=jnp.float32)
    # PyTorch Linear weight is (out, in); we store the transposed (in, out) form.
    w1 = jax.random.normal(k1, (C, CR), dtype=jnp.float32) * 0.5
    b1 = jax.random.normal(k2, (CR,), dtype=jnp.float32) * 0.1
    w2 = jax.random.normal(k3, (CR, C), dtype=jnp.float32) * 0.5
    b2 = jax.random.normal(k4, (C,), dtype=jnp.float32) * 0.1

    out = se_layer(x, w1, b1, w2, b2)
    out = jax.block_until_ready(out)

    ref = se_layer_ref(x, w1, b1, w2, b2)
    assert out.shape == (N, C, H, W)
    assert jnp.allclose(out, ref, atol=1e-5, rtol=1e-5), "mismatch vs reference"

    print("KERNEL_OK")
</pallas_src>

<mosaic_0001>
module attributes {stable_mosaic.version = 11 : i64} {
  func.func @se_kernel(%arg0: i32, %arg1: memref<1x4x256xf32, #tpu.memory_space<vmem>>, %arg2: memref<2x4xf32, #tpu.memory_space<vmem>>, %arg3: memref<1x2xf32, #tpu.memory_space<vmem>>, %arg4: memref<4x2xf32, #tpu.memory_space<vmem>>, %arg5: memref<1x4xf32, #tpu.memory_space<vmem>>, %arg6: memref<1x4x256xf32, #tpu.memory_space<vmem>>) attributes {dimension_semantics = [#tpu.dimension_semantics<parallel>], iteration_bounds = array<i64: 2>, scalar_prefetch = 0 : i64, scratch_operands = 0 : i64, tpu.core_type = #tpu.core_type<tc>, window_params = [{transform_indices = @transform_0, window_bounds = array<i64: 1, 4, 256>}, {pipeline_mode = #tpu.pipeline_mode<synchronous>, transform_indices = @transform_1, window_bounds = array<i64: 2, 4>}, {pipeline_mode = #tpu.pipeline_mode<synchronous>, transform_indices = @transform_2, window_bounds = array<i64: 1, 2>}, {pipeline_mode = #tpu.pipeline_mode<synchronous>, transform_indices = @transform_3, window_bounds = array<i64: 4, 2>}, {pipeline_mode = #tpu.pipeline_mode<synchronous>, transform_indices = @transform_4, window_bounds = array<i64: 1, 4>}, {transform_indices = @transform_5, window_bounds = array<i64: 1, 4, 256>}]} {
    %c0 = arith.constant 0 : index
    %c0_0 = arith.constant 0 : index
    %c0_1 = arith.constant 0 : index
    %0 = vector.load %arg1[%c0, %c0_0, %c0_1] : memref<1x4x256xf32, #tpu.memory_space<vmem>>, vector<1x4x256xf32>
    %cst = arith.constant dense<0.000000e+00> : vector<1x4xf32>
    %1 = vector.multi_reduction <add>, %0, %cst [2] : vector<1x4x256xf32> to vector<1x4xf32>
    %cst_2 = arith.constant 3.906250e-03 : f32
    %2 = vector.broadcast %cst_2 : f32 to vector<1x4xf32>
    %3 = arith.mulf %1, %2 : vector<1x4xf32>
    %4 = vector.shape_cast %3 : vector<1x4xf32> to vector<1x1x4xf32>
    %c0_3 = arith.constant 0 : index
    %c0_4 = arith.constant 0 : index
    %5 = vector.load %arg2[%c0_3, %c0_4] : memref<2x4xf32, #tpu.memory_space<vmem>>, vector<2x4xf32>
    %6 = vector.shape_cast %5 : vector<2x4xf32> to vector<1x2x4xf32>
    %7 = vector.broadcast %4 : vector<1x1x4xf32> to vector<1x2x4xf32>
    %8 = arith.mulf %7, %6 : vector<1x2x4xf32>
    %cst_5 = arith.constant dense<0.000000e+00> : vector<1x2xf32>
    %9 = vector.multi_reduction <add>, %8, %cst_5 [2] : vector<1x2x4xf32> to vector<1x2xf32>
    %c0_6 = arith.constant 0 : index
    %c0_7 = arith.constant 0 : index
    %10 = vector.load %arg3[%c0_6, %c0_7] : memref<1x2xf32, #tpu.memory_space<vmem>>, vector<1x2xf32>
    %11 = arith.addf %9, %10 : vector<1x2xf32>
    %cst_8 = arith.constant 0.000000e+00 : f32
    %12 = vector.broadcast %cst_8 : f32 to vector<1x2xf32>
    %13 = arith.maximumf %11, %12 : vector<1x2xf32>
    %14 = vector.shape_cast %13 : vector<1x2xf32> to vector<1x1x2xf32>
    %c0_9 = arith.constant 0 : index
    %c0_10 = arith.constant 0 : index
    %15 = vector.load %arg4[%c0_9, %c0_10] : memref<4x2xf32, #tpu.memory_space<vmem>>, vector<4x2xf32>
    %16 = vector.shape_cast %15 : vector<4x2xf32> to vector<1x4x2xf32>
    %17 = vector.broadcast %14 : vector<1x1x2xf32> to vector<1x4x2xf32>
    %18 = arith.mulf %17, %16 : vector<1x4x2xf32>
    %cst_11 = arith.constant dense<0.000000e+00> : vector<1x4xf32>
    %19 = vector.multi_reduction <add>, %18, %cst_11 [2] : vector<1x4x2xf32> to vector<1x4xf32>
    %c0_12 = arith.constant 0 : index
    %c0_13 = arith.constant 0 : index
    %20 = vector.load %arg5[%c0_12, %c0_13] : memref<1x4xf32, #tpu.memory_space<vmem>>, vector<1x4xf32>
    %21 = arith.addf %19, %20 : vector<1x4xf32>
    %22 = arith.negf %21 : vector<1x4xf32>
    %23 = math.exp %22 : vector<1x4xf32>
    %cst_14 = arith.constant 1.000000e+00 : f32
    %24 = vector.broadcast %cst_14 : f32 to vector<1x4xf32>
    %25 = arith.addf %24, %23 : vector<1x4xf32>
    %26 = arith.divf %24, %25 : vector<1x4xf32>
    %c0_15 = arith.constant 0 : index
    %c0_16 = arith.constant 0 : index
    %c0_17 = arith.constant 0 : index
    %27 = vector.load %arg1[%c0_15, %c0_16, %c0_17] : memref<1x4x256xf32, #tpu.memory_space<vmem>>, vector<1x4x256xf32>
    %28 = vector.shape_cast %26 : vector<1x4xf32> to vector<1x4x1xf32>
    %29 = vector.broadcast %28 : vector<1x4x1xf32> to vector<1x4x256xf32>
    %30 = arith.mulf %27, %29 : vector<1x4x256xf32>
    %c0_18 = arith.constant 0 : index
    %c0_19 = arith.constant 0 : index
    %c0_20 = arith.constant 0 : index
    %31 = vector.load %arg6[%c0_18, %c0_19, %c0_20] : memref<1x4x256xf32, #tpu.memory_space<vmem>>, vector<1x4x256xf32>
    tpu.vector_store %arg6[%c0_18, %c0_19, %c0_20], %30 {strides = array<i32>} : memref<1x4x256xf32, #tpu.memory_space<vmem>>, vector<1x4x256xf32>,
    return
  }
  func.func @transform_0(%arg0: i32) -> (i32, i32, i32) {
    %c0_i32 = arith.constant 0 : i32
    %c0_i32_0 = arith.constant 0 : i32
    %c0_i32_1 = arith.constant 0 : i32
    return %arg0, %c0_i32, %c0_i32_0 : i32, i32, i32
  }
  func.func @transform_1(%arg0: i32) -> (i32, i32) {
    %c0_i32 = arith.constant 0 : i32
    %c0_i32_0 = arith.constant 0 : i32
    %c0_i32_1 = arith.constant 0 : i32
    return %c0_i32, %c0_i32_0 : i32, i32
  }
  func.func @transform_2(%arg0: i32) -> (i32, i32) {
    %c0_i32 = arith.constant 0 : i32
    %c0_i32_0 = arith.constant 0 : i32
    %c0_i32_1 = arith.constant 0 : i32
    return %c0_i32, %c0_i32_0 : i32, i32
  }
  func.func @transform_3(%arg0: i32) -> (i32, i32) {
    %c0_i32 = arith.constant 0 : i32
    %c0_i32_0 = arith.constant 0 : i32
    %c0_i32_1 = arith.constant 0 : i32
    return %c0_i32, %c0_i32_0 : i32, i32
  }
  func.func @transform_4(%arg0: i32) -> (i32, i32) {
    %c0_i32 = arith.constant 0 : i32
    %c0_i32_0 = arith.constant 0 : i32
    %c0_i32_1 = arith.constant 0 : i32
    return %c0_i32, %c0_i32_0 : i32, i32
  }
  func.func @transform_5(%arg0: i32) -> (i32, i32, i32) {
    %c0_i32 = arith.constant 0 : i32
    %c0_i32_0 = arith.constant 0 : i32
    %c0_i32_1 = arith.constant 0 : i32
    return %arg0, %c0_i32, %c0_i32_0 : i32, i32, i32
  }
}

</mosaic_0001>

<llo_original>
// kernel: tpu_custom_call.1
$region0: #{tpu_custom_call.1}
  #allocation0 [shape = 'u32[]', space=smem, size = 0x4, offset = 0x4, fixed_abs, tag = 'smem constant byte address 0x4 - core index']
  #allocation1 [shape = 'u32[144,128]{1,0:T(1,128)}', space=vmem, size = 0x12000, scoped, tag = 'internal scratch']
  %s0 = inlined_call_operand.hbm [shape: f32[2,4,256], index: 0, kind: input, shape index: {}]
  %s1 = inlined_call_operand.vmem [shape: f32[2,4], index: 1, kind: input, shape index: {}]
  %s2 = inlined_call_operand.vmem [shape: f32[1,2], index: 2, kind: input, shape index: {}]
  %s3 = inlined_call_operand.vmem [shape: f32[4,2], index: 3, kind: input, shape index: {}]
  %s4 = inlined_call_operand.vmem [shape: f32[1,4], index: 4, kind: input, shape index: {}]
  %s5 = inlined_call_operand.hbm [shape: f32[2,4,256], index: 5, kind: output, shape index: {}]
  %s6 = sld [smem:[#allocation0]]
  $region57: #{tpu_custom_call.1} parent=0
    _
  %s8 = ssub.s32 1, %s6
  %s9 = scalar_select 0, %s8, %s6
  $region1: #{tpu_custom_call.1} parent=0
    #allocation2 [shape = 'u8[8192]{0}', space=vmem, size = 0x2000, scoped, tag = 'input window, operand 0']
    #allocation3 [shape = 's32[2]{0}', space=sflag, size = 0x8, scoped, tag = 'scoped memory for tpu_custom_call.1']
    #allocation4 [shape = 's32[2]{0}', space=sflag, size = 0x8, scoped, tag = 'scoped memory for tpu_custom_call.1']
    #allocation5 [shape = 'u8[8192]{0}', space=vmem, size = 0x2000, scoped, tag = 'output window, operand 0']
    %10 = vsyncpa [#allocation3], 0
    %s11 = scalar_lea.sflag [#allocation3], 1
    %12 = vsyncpa %s11, 0
    %13 = vsyncpa [#allocation4], 0
    %s14 = scalar_lea.sflag [#allocation4], 1
    %15 = vsyncpa %s14, 0
    loop: start=0, step=1, limit=4
    $region2: #{tpu_custom_call.1} parent=1 // loop_pre_header
      _
    $region3: #{tpu_custom_call.1} parent=1 // loop_header
      %s17 = sphi 0, %s21
      %p18 = scmp.ge.s32.totalorder %s17, 4
      %s27 = sphi 0, %s29
      %s30 = sphi 0, %s27
      %s31 = sphi 0, %s30
      %s47 = sphi 0, %s31
      %s51 = sphi 0, %s51
      %s53 = sphi 0, %s51
      %s54 = sphi 0, %s53
      %s68 = sphi 0, %s54
      %s72 = sphi 0, %s72
      %s74 = sphi 0, %s72
      %s75 = sphi 0, %s74
      %s89 = sphi 0, %s75
      %s93 = sphi 0, %s93
      %s95 = sphi 0, %s93
      %s96 = sphi 0, %s95
      %s110 = sphi 0, %s96
      %s114 = sphi 0, %s114
      %s116 = sphi 0, %s114
      %s117 = sphi 0, %s116
      %s131 = sphi 0, %s117
      %s137 = sphi 0, %s139
      %s140 = sphi 0, %s137
      %s141 = sphi 0, %s140
      %s157 = sphi 0, %s141
    $region4: #{tpu_custom_call.1} parent=1 // loop_header_branch
      %20 = sbr.rel (%p18) target = $region8
    $region5: #{tpu_custom_call.1} parent=1 // loop_body
      %s22 = ssub.s32 %s17, 1
      %s23 = ssub.s32 %s17, 2
      %s24 = sadd.s32 %s17, 1
      %s25 = ssub.s32 %s17, %s24
      %p26 = scmp.eq.s32.totalorder %s25, 0
      %s28 = sadd.s32 %s27, 1
      %s29 = scalar_select %p26, %s27, %s28
      %p32 = pneg %p26
      %p33 = scmp.eq.s32.totalorder %s17, 1
      %p34 = por %p32, %p33
      %p35 = scmp.ne.s32.totalorder %s27, %s30
      %p36 = scmp.eq.s32.totalorder %s17, 0
      %p37 = por %p35, %p36
      %p38 = scmp.ne.s32.totalorder %s27, %s30
      %p39 = scmp.eq.s32.totalorder %s22, 1
      %p40 = por %p38, %p39
      %p41 = scmp.ne.s32.totalorder %s30, %s31
      %p42 = scmp.eq.s32.totalorder %s22, 0
      %p43 = por %p41, %p42
      %p44 = scmp.ne.s32.totalorder %s30, %s31
      %p45 = scmp.eq.s32.totalorder %s23, 1
      %p46 = por %p44, %p45
      %p48 = scmp.ne.s32.totalorder %s31, %s47
      %p49 = scmp.eq.s32.totalorder %s23, 0
      %p50 = por %p48, %p49
      %s52 = sadd.s32 %s51, 1
      %p55 = scmp.eq.s32.totalorder %s17, 1
      %p56 = scmp.ne.s32.totalorder %s51, %s53
      %p57 = scmp.eq.s32.totalorder %s17, 0
      %p58 = por %p56, %p57
      %p59 = scmp.ne.s32.totalorder %s51, %s53
      %p60 = scmp.eq.s32.totalorder %s22, 1
      %p61 = por %p59, %p60
      %p62 = scmp.ne.s32.totalorder %s53, %s54
      %p63 = scmp.eq.s32.totalorder %s22, 0
      %p64 = por %p62, %p63
      %p65 = scmp.ne.s32.totalorder %s53, %s54
      %p66 = scmp.eq.s32.totalorder %s23, 1
      %p67 = por %p65, %p66
      %p69 = scmp.ne.s32.totalorder %s54, %s68
      %p70 = scmp.eq.s32.totalorder %s23, 0
      %p71 = por %p69, %p70
      %s73 = sadd.s32 %s72, 1
      %p76 = scmp.eq.s32.totalorder %s17, 1
      %p77 = scmp.ne.s32.totalorder %s72, %s74
      %p78 = scmp.eq.s32.totalorder %s17, 0
      %p79 = por %p77, %p78
      %p80 = scmp.ne.s32.totalorder %s72, %s74
      %p81 = scmp.eq.s32.totalorder %s22, 1
      %p82 = por %p80, %p81
      %p83 = scmp.ne.s32.totalorder %s74, %s75
      %p84 = scmp.eq.s32.totalorder %s22, 0
      %p85 = por %p83, %p84
      %p86 = scmp.ne.s32.totalorder %s74, %s75
      %p87 = scmp.eq.s32.totalorder %s23, 1
      %p88 = por %p86, %p87
      %p90 = scmp.ne.s32.totalorder %s75, %s89
      %p91 = scmp.eq.s32.totalorder %s23, 0
      %p92 = por %p90, %p91
      %s94 = sadd.s32 %s93, 1
      %p97 = scmp.eq.s32.totalorder %s17, 1
      %p98 = scmp.ne.s32.totalorder %s93, %s95
      %p99 = scmp.eq.s32.totalorder %s17, 0
      %p100 = por %p98, %p99
      %p101 = scmp.ne.s32.totalorder %s93, %s95
      %p102 = scmp.eq.s32.totalorder %s22, 1
      %p103 = por %p101, %p102
      %p104 = scmp.ne.s32.totalorder %s95, %s96
      %p105 = scmp.eq.s32.totalorder %s22, 0
      %p106 = por %p104, %p105
      %p107 = scmp.ne.s32.totalorder %s95, %s96
      %p108 = scmp.eq.s32.totalorder %s23, 1
      %p109 = por %p107, %p108
      %p111 = scmp.ne.s32.totalorder %s96, %s110
      %p112 = scmp.eq.s32.totalorder %s23, 0
      %p113 = por %p111, %p112
      %s115 = sadd.s32 %s114, 1
      %p118 = scmp.eq.s32.totalorder %s17, 1
      %p119 = scmp.ne.s32.totalorder %s114, %s116
      %p120 = scmp.eq.s32.totalorder %s17, 0
      %p121 = por %p119, %p120
      %p122 = scmp.ne.s32.totalorder %s114, %s116
      %p123 = scmp.eq.s32.totalorder %s22, 1
      %p124 = por %p122, %p123
      %p125 = scmp.ne.s32.totalorder %s116, %s117
      %p126 = scmp.eq.s32.totalorder %s22, 0
      %p127 = por %p125, %p126
      %p128 = scmp.ne.s32.totalorder %s116, %s117
      %p129 = scmp.eq.s32.totalorder %s23, 1
      %p130 = por %p128, %p129
      %p132 = scmp.ne.s32.totalorder %s117, %s131
      %p133 = scmp.eq.s32.totalorder %s23, 0
      %p134 = por %p132, %p133
      %s135 = ssub.s32 %s17, %s24
      %p136 = scmp.eq.s32.totalorder %s135, 0
      %s138 = sadd.s32 %s137, 1
      %s139 = scalar_select %p136, %s137, %s138
      %p142 = pneg %p136
      %p143 = scmp.eq.s32.totalorder %s17, 1
      %p144 = por %p142, %p143
      %p145 = scmp.ne.s32.totalorder %s137, %s140
      %p146 = scmp.eq.s32.totalorder %s17, 0
      %p147 = por %p145, %p146
      %p148 = scmp.ne.s32.totalorder %s137, %s140
      %p149 = scmp.eq.s32.totalorder %s22, 1
      %p150 = por %p148, %p149
      %p151 = scmp.ne.s32.totalorder %s140, %s141
      %p152 = scmp.eq.s32.totalorder %s22, 0
      %p153 = por %p151, %p152
      %p154 = scmp.ne.s32.totalorder %s140, %s141
      %p155 = scmp.eq.s32.totalorder %s23, 1
      %p156 = por %p154, %p155
      %p158 = scmp.ne.s32.totalorder %s141, %s157
      %p159 = scmp.eq.s32.totalorder %s23, 0
      %p160 = por %p158, %p159
      %p161 = scmp.le.s32.totalorder 1, %s17
      %p162 = scmp.lt.s32.totalorder %s17, 3
      %p163 = pnand %p161, %p162
      %p164 = pneg %p163
      // Predicated region
      $region9: #{tpu_custom_call.1} parent=5 // pred_check
        _
      $region10: #{tpu_custom_call.1} parent=5 // pred_check_branch
        %166 = sbr.rel (%p163) target = $region12
      $region11: #{tpu_custom_call.1} parent=5 // pred_region
        %s167 = ssub.s32 %s17, 1
        // Predicated region
        $region13: #{tpu_custom_call.1} parent=11 // pred_check
          %p168 = pneg %p64
        $region14: #{tpu_custom_call.1} parent=11 // pred_check_branch
          %170 = sbr.rel (%p168) target = $region16
        $region15: #{tpu_custom_call.1} parent=11 // pred_region
          _
        $region16: #{tpu_custom_call.1} parent=11 // pred_fallthru
          _
        // Predicated region
        $region17: #{tpu_custom_call.1} parent=11 // pred_check
          %p171 = pneg %p85
        $region18: #{tpu_custom_call.1} parent=11 // pred_check_branch
          %173 = sbr.rel (%p171) target = $region20
        $region19: #{tpu_custom_call.1} parent=11 // pred_region
          _
        $region20: #{tpu_custom_call.1} parent=11 // pred_fallthru
          _
        // Predicated region
        $region21: #{tpu_custom_call.1} parent=11 // pred_check
          %p174 = pneg %p106
        $region22: #{tpu_custom_call.1} parent=11 // pred_check_branch
          %176 = sbr.rel (%p174) target = $region24
        $region23: #{tpu_custom_call.1} parent=11 // pred_region
          _
        $region24: #{tpu_custom_call.1} parent=11 // pred_fallthru
          _
        // Predicated region
        $region25: #{tpu_custom_call.1} parent=11 // pred_check
          %p177 = pneg %p127
        $region26: #{tpu_custom_call.1} parent=11 // pred_check_branch
          %179 = sbr.rel (%p177) target = $region28
        $region27: #{tpu_custom_call.1} parent=11 // pred_region
          _
        $region28: #{tpu_custom_call.1} parent=11 // pred_fallthru
          _
      $region12: #{tpu_custom_call.1} parent=5 // pred_fallthru
        _
      %p180 = scmp.lt.s32.totalorder %s17, 2
      // Predicated region
      $region29: #{tpu_custom_call.1} parent=5 // pred_check
        %p181 = pneg %p180
      $region30: #{tpu_custom_call.1} parent=5 // pred_check_branch
        %183 = sbr.rel (%p181) target = $region32
      $region31: #{tpu_custom_call.1} parent=5 // pred_region
        // Predicated region
        $region33: #{tpu_custom_call.1} parent=31 // pred_check
          %p184 = pneg %p37
        $region34: #{tpu_custom_call.1} parent=31 // pred_check_branch
          %186 = sbr.rel (%p184) target = $region36
        $region35: #{tpu_custom_call.1} parent=31 // pred_region
          %s187 = sand.u32 %s27, 1
          %s188 = scalar_lea.sflag [#allocation3], %s187
          %s189 = sand.u32 %s27, 1
          %s190 = smul.addr %s189, 8
          %s191 = scalar_lea.vmem [#allocation2], %s190
          %s193 = ssub.s32 128, 128
          %194 = vsyncadd %s188, %s193
          %s195 = smul.addr %s17, 2
          %s196 = smul.addr %s195, 64
          %s197 = scalar_lea.hbm %s0, %s196
          %s199 = sshll.u32 %s191, 4
          %s200 = int_to_ptr.vmem [resolvable:$true] %s199
          %202 = dma.hbm_to_vmem [thread:$0]  %s197, 128, %s200, %s188
        $region36: #{tpu_custom_call.1} parent=31 // pred_fallthru
          _
      $region32: #{tpu_custom_call.1} parent=5 // pred_fallthru
        _
      %p203 = scmp.le.s32.totalorder 1, %s17
      %p204 = scmp.lt.s32.totalorder %s17, 3
      %p205 = pnand %p203, %p204
      %p206 = pneg %p205
      // Predicated region
      $region37: #{tpu_custom_call.1} parent=5 // pred_check
        _
      $region38: #{tpu_custom_call.1} parent=5 // pred_check_branch
        %208 = sbr.rel (%p205) target = $region40
      $region39: #{tpu_custom_call.1} parent=5 // pred_region
        %s209 = ssub.s32 %s17, 1
        %s210 = sand.u32 %s30, 1
        %s211 = scalar_lea.sflag [#allocation3], %s210
        %s212 = sand.u32 %s30, 1
        %s213 = smul.addr %s212, 8
        %s214 = scalar_lea.vmem [#allocation2], %s213
        // Predicated region
        $region41: #{tpu_custom_call.1} parent=39 // pred_check
          %p215 = pneg %p43
        $region42: #{tpu_custom_call.1} parent=39 // pred_check_branch
          %217 = sbr.rel (%p215) target = $region44
        $region43: #{tpu_custom_call.1} parent=39 // pred_region
          %218 = dma.done %s211, 128
        $region44: #{tpu_custom_call.1} parent=39 // pred_fallthru
          _
        %s219 = sand.u32 %s30, 1
        %s220 = scalar_lea.sflag [#allocation3], %s219
        %s221 = sand.u32 %s30, 1
        %s222 = smul.addr %s221, 8
        %s223 = scalar_lea.vmem [#allocation2], %s222
        %p224 = pneg %p43
        %p225 = pneg %p40
        %p226 = pneg %p64
        %p227 = pneg %p61
        %p228 = pneg %p85
        %p229 = pneg %p82
        %p230 = pneg %p106
        %p231 = pneg %p103
        %p232 = pneg %p127
        %p233 = pneg %p124
        %p234 = pneg %p153
        %p235 = pneg %p150
        %s236 = sand.u32 %s140, 1
        %s237 = scalar_lea.sflag [#allocation4], %s236
        %s238 = sand.u32 %s140, 1
        %s239 = smul.addr %s238, 8
        %s240 = scalar_lea.vmem [#allocation5], %s239
        %v241 = vld [vmem:[%s214] sm:$0xff]
        %v243 = vcombine.high %v241, %v241
        %vm245 = vcmask 1043456
        %v246 = vsel %vm245, %v241, 0.0
        %v247 = vsel %vm245, %v243, 0.0
        %v248 = vadd.f32 %v246, %v247
        %249 = vadd.xlane.f32.xlu0 %v248
        %v250 = vpop.xlane.xlu0 %249
        %v251 = vmul.f32 %v250, 0.00390625
        %v252 = vld [vmem:[%s1] sm:$0x3]
        %v254 = vlaneseq
        %v255 = vshrl.u32 %v254, 7
        %v256 = vsub.s32 0, %v255
        %v257 = vrot.slane %v252, %v256
        %259 = vbcast.lane.b32.xlu0 %v257, 256
        %v260 = vpop.permute.xlu0 %259
        %v261 = vlaneseq
        %v262 = vshrl.u32 %v261, 7
        %v263 = vsub.s32 1, %v262
        %v264 = vrot.slane %v252, %v263
        %266 = vbcast.lane.b32.xlu0 %v264, 256
        %v267 = vpop.permute.xlu0 %266
        %v270 = vmul.f32 %v251, %v260
        %v271 = vmul.f32 %v251, %v267
        %274 = vset.pattern.permute.xlu0 0
        %275 = vperm.xlu0 %274, %v270
        %v276 = vpop.permute.xlu0 %275
        %277 = vset.pattern.permute.xlu0 0
        %278 = vperm.xlu0 %277, %v271
        %v279 = vpop.permute.xlu0 %278
        %v280 = vlaneseq
        %v281 = vand.u32 %v280, 127
        %v282 = vlaneseq
        %v283 = vshrl.u32 %v282, 7
        %v284 = vsub.s32 %v281, %v283
        %v285 = vrot.slane %v276, %v284
        %v286 = vlaneseq
        %v287 = vshrl.u32 %v286, 7
        %v288 = vsub.s32 %v281, %v287
        %v289 = vrot.slane %v279, %v288
        %vm290 = vcmask 1041409
        %v291 = vsel %vm290, %v289, %v285
        %vm293 = vcmask 25600
        %v294 = vsel %vm293, %v291, 0.0
        %295 = vadd.xlane.f32.xlu0 %v294
        %v296 = vpop.xlane.xlu0 %295
        %v297 = vld [vmem:[%s2] sm:$0x1]
        %v299 = vlaneseq
        %v300 = vshrl.u32 %v299, 7
        %v301 = vsub.s32 0, %v300
        %v302 = vrot.slane %v297, %v301
        %304 = vbcast.lane.b32.xlu0 %v302, 256
        %v305 = vpop.permute.xlu0 %304
        %v307 = vadd.f32 %v296, %v305
        %v308 = vmax.f32 %v307, 0.0
        %v309 = vld [vmem:[%s3] sm:$0xf]
        %v311 = vlaneseq
        %v312 = vshrl.u32 %v311, 7
        %v313 = vsub.s32 0, %v312
        %v314 = vrot.slane %v309, %v313
        %316 = vbcast.lane.b32.xlu0 %v314, 256
        %v317 = vpop.permute.xlu0 %316
        %v318 = vlaneseq
        %v319 = vshrl.u32 %v318, 7
        %v320 = vsub.s32 1, %v319
        %v321 = vrot.slane %v309, %v320
        %323 = vbcast.lane.b32.xlu0 %v321, 256
        %v324 = vpop.permute.xlu0 %323
        %v325 = vlaneseq
        %v326 = vshrl.u32 %v325, 7
        %v327 = vsub.s32 2, %v326
        %v328 = vrot.slane %v309, %v327
        %330 = vbcast.lane.b32.xlu0 %v328, 256
        %v331 = vpop.permute.xlu0 %330
        %v332 = vlaneseq
        %v333 = vshrl.u32 %v332, 7
        %v334 = vsub.s32 3, %v333
        %v335 = vrot.slane %v309, %v334
        %337 = vbcast.lane.b32.xlu0 %v335, 256
        %v338 = vpop.permute.xlu0 %337
        %v343 = vmul.f32 %v308, %v317
        %v344 = vmul.f32 %v308, %v324
        %v345 = vmul.f32 %v308, %v331
        %v346 = vmul.f32 %v308, %v338
        %351 = vset.pattern.permute.xlu0 0
        %352 = vperm.xlu0 %351, %v343
        %v353 = vpop.permute.xlu0 %352
        %354 = vset.pattern.permute.xlu0 0
        %355 = vperm.xlu0 %354, %v344
        %v356 = vpop.permute.xlu0 %355
        %357 = vset.pattern.permute.xlu0 0
        %358 = vperm.xlu0 %357, %v345
        %v359 = vpop.permute.xlu0 %358
        %360 = vset.pattern.permute.xlu0 0
        %361 = vperm.xlu0 %360, %v346
        %v362 = vpop.permute.xlu0 %361
        %v363 = vlaneseq
        %v364 = vshrl.u32 %v363, 7
        %v365 = vsub.s32 %v281, %v364
        %v366 = vrot.slane %v353, %v365
        %v367 = vlaneseq
        %v368 = vshrl.u32 %v367, 7
        %v369 = vsub.s32 %v281, %v368
        %v370 = vrot.slane %v356, %v369
        %v371 = vlaneseq
        %v372 = vshrl.u32 %v371, 7
        %v373 = vsub.s32 %v281, %v372
        %v374 = vrot.slane %v359, %v373
        %v375 = vlaneseq
        %v376 = vshrl.u32 %v375, 7
        %v377 = vsub.s32 %v281, %v376
        %v378 = vrot.slane %v362, %v377
        %v379 = vsel %vm290, %v370, %v366
        %vm380 = vcmask 1042434
        %v381 = vsel %vm380, %v374, %v379
        %vm382 = vcmask 1043459
        %v383 = vsel %vm382, %v378, %v381
        %vm385 = vcmask 11264
        %v386 = vsel %vm385, %v383, 0.0
        %387 = vadd.xlane.f32.xlu0 %v386
        %v388 = vpop.xlane.xlu0 %387
        %v389 = vld [vmem:[%s4] sm:$0x1]
        %v391 = vlaneseq
        %v392 = vshrl.u32 %v391, 7
        %v393 = vsub.s32 0, %v392
        %v394 = vrot.slane %v389, %v393
        %396 = vbcast.lane.b32.xlu0 %v394, 256
        %v397 = vpop.permute.xlu0 %396
        %v399 = vadd.f32 %v388, %v397
        %v400 = vxor.u32 %v399, 2147483648
        %v401 = vmul.f32 %v400, 1.442695
        %v402 = vpow.pop %v401
        %v403 = vadd.f32 %v402, 1.0
        %v404 = vrcp.pop %v403
        %v405 = vmul.f32 1.0, %v404
        %407 = vset.pattern.permute.xlu0 0
        %408 = vperm.xlu0 %407, %v405
        %v409 = vpop.permute.xlu0 %408
        %v411 = vunpack.c.l.s4 839922192
        %v412 = vunpack.c.0.s8 %v411
        %v413 = vlaneseq
        %v414 = vshrl.u32 %v413, 7
        %v415 = vsub.s32 %v412, %v414
        %v416 = vrot.slane %v409, %v415
        %v418 = vmul.f32 %v241, %v416
        %419 = vst [vmem:[%s240] sm:$0xff] %v418
        %s420 = sand.u32 %s140, 1
        %s421 = scalar_lea.sflag [#allocation4], %s420
        %s422 = sand.u32 %s140, 1
        %s423 = smul.addr %s422, 8
        %s424 = scalar_lea.vmem [#allocation5], %s423
        // Predicated region
        $region45: #{tpu_custom_call.1} parent=39 // pred_check
          %p425 = pneg %p150
        $region46: #{tpu_custom_call.1} parent=39 // pred_check_branch
          %427 = sbr.rel (%p425) target = $region48
        $region47: #{tpu_custom_call.1} parent=39 // pred_region
          %s429 = ssub.s32 128, 128
          %430 = vsyncadd %s421, %s429
          %s431 = smul.addr %s22, 2
          %s432 = smul.addr %s431, 64
          %s433 = scalar_lea.hbm %s5, %s432
          %s435 = sshll.u32 %s424, 4
          %s436 = int_to_ptr.vmem [resolvable:$true] %s435
          %438 = dma.vmem_to_hbm [thread:$0]  %s436, 128, %s433, %s421
        $region48: #{tpu_custom_call.1} parent=39 // pred_fallthru
          _
      $region40: #{tpu_custom_call.1} parent=5 // pred_fallthru
        _
      %p439 = scmp.le.s32.totalorder 2, %s17
      // Predicated region
      $region49: #{tpu_custom_call.1} parent=5 // pred_check
        %p440 = pneg %p439
      $region50: #{tpu_custom_call.1} parent=5 // pred_check_branch
        %442 = sbr.rel (%p440) target = $region52
      $region51: #{tpu_custom_call.1} parent=5 // pred_region
        %s443 = ssub.s32 %s17, 2
        // Predicated region
        $region53: #{tpu_custom_call.1} parent=51 // pred_check
          %p444 = pneg %p156
        $region54: #{tpu_custom_call.1} parent=51 // pred_check_branch
          %446 = sbr.rel (%p444) target = $region56
        $region55: #{tpu_custom_call.1} parent=51 // pred_region
          %s447 = sand.u32 %s141, 1
          %s448 = scalar_lea.sflag [#allocation4], %s447
          %s449 = sand.u32 %s141, 1
          %s450 = smul.addr %s449, 8
          %s451 = scalar_lea.vmem [#allocation5], %s450
          %452 = dma.done %s448, 128
        $region56: #{tpu_custom_call.1} parent=51 // pred_fallthru
          _
      $region52: #{tpu_custom_call.1} parent=5 // pred_fallthru
        _
    $region6: #{tpu_custom_call.1} parent=1 // loop_footer
      %s21 = sadd.s32 1, %s17
    $region7: #{tpu_custom_call.1} parent=1 // loop_footer_branch
      %16 = sbr.rel target = $region3
    $region8: #{tpu_custom_call.1} parent=1 // loop_exit
      _
    %453 = vsyncpa [#allocation3], 1
    %s454 = scalar_lea.sflag [#allocation3], 1
    %455 = vsyncpa %s454, 1
    %456 = vsyncpa [#allocation4], 1
    %s457 = scalar_lea.sflag [#allocation4], 1
    %458 = vsyncpa %s457, 1

</llo_original>
